<compile_context>
chip_gen: v7x
topology: tpu7x:2x2x1
jax: 0.10.0
libtpu: 0.0.40
codegen_flags: <defaults>
</compile_context>

<pallas_src>
import functools

import jax
import jax.numpy as jnp
from jax.experimental import pallas as pl
from jax.experimental.pallas import tpu as pltpu

LANES = 128
SUBLANES = 8
TILE_BYTES = 2 * 1024 * 1024  # per-input block bytes (~2 MiB)


def _num_tensorcores():
    """2 on chips with 2 TensorCores per chip (v7x); 1 on v5e/v6e; safe default 1."""
    try:
        kind = jax.devices()[0].device_kind.lower()
    except Exception:  # pragma: no cover - defensive
        return 1
    return 2 if "v7" in kind else 1


def _xtanh_kernel(x_ref, y_ref, o_ref, *, tile_rows, steps_per_partial,
                  rows_valid, nblocks, need_mask):
    c = pl.program_id(0)
    s = pl.program_id(1)

    @pl.when(s == 0)
    def _():
        o_ref[...] = jnp.zeros_like(o_ref)

    def accumulate(mask_rows):
        # Upcast in-register only; HBM/VMEM traffic stays in the input dtype.
        d = x_ref[...].astype(jnp.float32) - y_ref[...].astype(jnp.float32)
        v = d * jnp.tanh(d)  # tanh -> EUP slot; free in a mem-bound kernel.
        if mask_rows:
            # Full-lane-width iota (no per-vreg lane broadcast inside the
            # select).  Rows past the end of the data -> 0; correct even if the
            # partially fetched tail block contains NaN/Inf garbage, because
            # jnp.where is a select.
            blk = c * steps_per_partial + s
            row_ids = (jax.lax.broadcasted_iota(jnp.int32, (tile_rows, LANES), 0)
                       + blk * tile_rows)
            v = jnp.where(row_ids < rows_valid, v, jnp.float32(0.0))
        # Vector-shaped partial sums: reduce tile_rows -> 8 sublanes with VPU
        # adds only; the expensive cross-lane reduce is deferred to the wrapper.
        o_ref[...] += v.reshape(tile_rows // SUBLANES, SUBLANES, LANES).sum(axis=0)

    if need_mask:
        # Only the globally-last block can be ragged (partials always divide
        # the block count evenly, so there are no clamped duplicate steps).
        blk = c * steps_per_partial + s
        is_ragged = blk == (nblocks - 1)

        @pl.when(jnp.logical_not(is_ragged))
        def _():
            accumulate(False)

        @pl.when(is_ragged)
        def _():
            accumulate(True)
    else:
        # Compile-time elided: fully unmasked steady state.
        accumulate(False)


def xtanh_loss(x, y, *, tile_bytes=TILE_BYTES):
    assert x.shape == y.shape, "XTanhLoss here requires matching shapes"
    n_total = x.size
    assert n_total > 0

    xf = jnp.ravel(x)  # contiguous flatten: bitcast, no copy
    yf = jnp.ravel(y)

    rows = n_total // LANES
    rem = n_total - rows * LANES

    total = jnp.float32(0.0)

    if rem:
        # <128-element tail: plain jnp on a tiny slice (negligible traffic),
        # instead of padding/copying both full inputs in HBM.
        xt = xf[rows * LANES:].astype(jnp.float32)
        yt = yf[rows * LANES:].astype(jnp.float32)
        dt = xt - yt
        total = total + jnp.sum(dt * jnp.tanh(dt))

    if rows:
        # When rem == 0 these slices are the full arrays -> pure bitcast view.
        x2 = xf[: rows * LANES].reshape(rows, LANES)
        y2 = yf[: rows * LANES].reshape(rows, LANES)

        itemsize = jnp.dtype(x2.dtype).itemsize
        # Sublane granularity depends on dtype packing (f32: 8, bf16: 16, i8: 32).
        sub = SUBLANES * max(1, 4 // itemsize)

        # Size the block by bytes (~tile_bytes per input), so bf16/int8 stream
        # the same bytes per step as f32.  Double-buffered 2-input footprint at
        # the 2 MiB default is 8 MiB -> fits every chip's default scoped VMEM.
        tr = max(sub, min(tile_bytes // (LANES * itemsize), rows))
        tr = max(sub, (tr // sub) * sub)

        nblocks = -(-rows // tr)  # ceil-div (Python int)
        need_mask = (rows % tr) != 0

        # Row-split across TensorCores only when it is free: 2 TCs available
        # and an even, non-trivial block count (no duplicates, no imbalance).
        num_partials = 1
        if _num_tensorcores() >= 2 and nblocks >= 4 and nblocks % 2 == 0:
            num_partials = 2
        steps = nblocks // num_partials

        kernel = functools.partial(
            _xtanh_kernel,
            tile_rows=tr,
            steps_per_partial=steps,
            rows_valid=rows,
            nblocks=nblocks,
            need_mask=need_mask,
        )

        def in_idx(c, s):
            return (c * steps + s, 0)

        n_kernel = rows * LANES
        cost = pl.CostEstimate(
            flops=3 * n_kernel,                 # sub, mul, reduce-add / element
            transcendentals=n_kernel,           # tanh / element
            bytes_accessed=2 * n_kernel * itemsize
            + num_partials * SUBLANES * LANES * 4,
        )

        out = pl.pallas_call(
            kernel,
            out_shape=jax.ShapeDtypeStruct((num_partials * SUBLANES, LANES),
                                           jnp.float32),
            grid_spec=pltpu.PrefetchScalarGridSpec(
                num_scalar_prefetch=0,
                grid=(num_partials, steps),
                in_specs=[
                    pl.BlockSpec((tr, LANES), in_idx),
                    pl.BlockSpec((tr, LANES), in_idx),
                ],
                out_specs=pl.BlockSpec((SUBLANES, LANES), lambda c, s: (c, 0)),
            ),
            compiler_params=pltpu.CompilerParams(
                dimension_semantics=("parallel", "arbitrary"),
            ),
            cost_estimate=cost,
        )(x2, y2)

        total = total + jnp.sum(out)

    return total / jnp.float32(n_total)


if __name__ == "__main__":
    key = jax.random.PRNGKey(0)
    k1, k2 = jax.random.split(key)

    # Small NCHW-like inputs (the loss is shape-agnostic).
    x = jax.random.normal(k1, (2, 4, 16, 16), dtype=jnp.float32)
    t = jax.random.normal(k2, (2, 4, 16, 16), dtype=jnp.float32)

    loss = xtanh_loss(x, t)
    jax.block_until_ready(loss)

    d = x - t
    ref = jnp.mean(d * jnp.tanh(d))
    assert jnp.allclose(loss, ref, rtol=1e-4, atol=1e-6), (loss, ref)

    # Several grid steps (even block count, unmasked steady-state accumulation;
    # exercises the 2-partial split on 2-TC chips).
    k3, k4 = jax.random.split(k1)
    xb = jax.random.normal(k3, (8, 64, 128), dtype=jnp.float32)
    tb = jax.random.normal(k4, (8, 64, 128), dtype=jnp.float32)
    loss_b = xtanh_loss(xb, tb, tile_bytes=64 * LANES * 4)  # tr = 64 rows
    jax.block_until_ready(loss_b)
    db = xb - tb
    ref_b = jnp.mean(db * jnp.tanh(db))
    assert jnp.allclose(loss_b, ref_b, rtol=1e-4, atol=1e-6), (loss_b, ref_b)

    # Ragged case: n % 128 != 0 (jnp tail) and rows % tile_rows != 0 (in-kernel
    # masked last block on real hardware, locking in OOB-fetch + select).
    k5, k6 = jax.random.split(k2)
    xc = jax.random.normal(k5, (5, 7, 100), dtype=jnp.float32)
    tc = jax.random.normal(k6, (5, 7, 100), dtype=jnp.float32)
    loss_c = xtanh_loss(xc, tc)
    jax.block_until_ready(loss_c)
    dc = xc - tc
    ref_c = jnp.mean(dc * jnp.tanh(dc))
    assert jnp.allclose(loss_c, ref_c, rtol=1e-4, atol=1e-6), (loss_c, ref_c)

    print("KERNEL_OK")
</pallas_src>

<mosaic_0001>
module attributes {stable_mosaic.version = 11 : i64} {
  func.func @_xtanh_kernel(%arg0: i32, %arg1: i32, %arg2: memref<16x128xf32, #tpu.memory_space<vmem>>, %arg3: memref<16x128xf32, #tpu.memory_space<vmem>>, %arg4: memref<8x128xf32, #tpu.memory_space<vmem>>) attributes {dimension_semantics = [#tpu.dimension_semantics<parallel>, #tpu.dimension_semantics<arbitrary>], iteration_bounds = array<i64: 1, 1>, scalar_prefetch = 0 : i64, scratch_operands = 0 : i64, tpu.core_type = #tpu.core_type<tc>, window_params = [{transform_indices = @transform_0, window_bounds = array<i64: 16, 128>}, {transform_indices = @transform_1, window_bounds = array<i64: 16, 128>}, {transform_indices = @transform_2, window_bounds = array<i64: 8, 128>}]} {
    %c0_i32 = arith.constant 0 : i32
    %0 = arith.cmpi eq, %arg1, %c0_i32 : i32
    %1 = arith.extui %0 : i1 to i32
    %c0_i32_0 = arith.constant 0 : i32
    %2 = arith.cmpi ne, %1, %c0_i32_0 : i32
    scf.if %2 {
      %cst_8 = arith.constant 0.000000e+00 : f32
      %13 = vector.broadcast %cst_8 : f32 to vector<8x128xf32>
      %c0_9 = arith.constant 0 : index
      %c0_10 = arith.constant 0 : index
      %14 = vector.load %arg4[%c0_9, %c0_10] : memref<8x128xf32, #tpu.memory_space<vmem>>, vector<8x128xf32>
      tpu.vector_store %arg4[%c0_9, %c0_10], %13 {strides = array<i32>} : memref<8x128xf32, #tpu.memory_space<vmem>>, vector<8x128xf32>,
    } else {
    }
    %c0 = arith.constant 0 : index
    %c0_1 = arith.constant 0 : index
    %3 = vector.load %arg2[%c0, %c0_1] : memref<16x128xf32, #tpu.memory_space<vmem>>, vector<16x128xf32>
    %c0_2 = arith.constant 0 : index
    %c0_3 = arith.constant 0 : index
    %4 = vector.load %arg3[%c0_2, %c0_3] : memref<16x128xf32, #tpu.memory_space<vmem>>, vector<16x128xf32>
    %5 = arith.subf %3, %4 : vector<16x128xf32>
    %6 = math.tanh %5 : vector<16x128xf32>
    %7 = arith.mulf %5, %6 : vector<16x128xf32>
    %c0_4 = arith.constant 0 : index
    %c0_5 = arith.constant 0 : index
    %8 = vector.load %arg4[%c0_4, %c0_5] : memref<8x128xf32, #tpu.memory_space<vmem>>, vector<8x128xf32>
    %9 = vector.shape_cast %7 : vector<16x128xf32> to vector<2x8x128xf32>
    %cst = arith.constant dense<0.000000e+00> : vector<8x128xf32>
    %10 = vector.multi_reduction <add>, %9, %cst [0] : vector<2x8x128xf32> to vector<8x128xf32>
    %11 = arith.addf %8, %10 : vector<8x128xf32>
    %c0_6 = arith.constant 0 : index
    %c0_7 = arith.constant 0 : index
    %12 = vector.load %arg4[%c0_6, %c0_7] : memref<8x128xf32, #tpu.memory_space<vmem>>, vector<8x128xf32>
    tpu.vector_store %arg4[%c0_6, %c0_7], %11 {strides = array<i32>} : memref<8x128xf32, #tpu.memory_space<vmem>>, vector<8x128xf32>,
    return
  }
  func.func @transform_0(%arg0: i32, %arg1: i32) -> (i32, i32) {
    %c1_i32 = arith.constant 1 : i32
    %0 = arith.muli %arg0, %c1_i32 : i32
    %1 = arith.addi %0, %arg1 : i32
    %c0_i32 = arith.constant 0 : i32
    %c0_i32_0 = arith.constant 0 : i32
    return %1, %c0_i32 : i32, i32
  }
  func.func @transform_1(%arg0: i32, %arg1: i32) -> (i32, i32) {
    %c1_i32 = arith.constant 1 : i32
    %0 = arith.muli %arg0, %c1_i32 : i32
    %1 = arith.addi %0, %arg1 : i32
    %c0_i32 = arith.constant 0 : i32
    %c0_i32_0 = arith.constant 0 : i32
    return %1, %c0_i32 : i32, i32
  }
  func.func @transform_2(%arg0: i32, %arg1: i32) -> (i32, i32) {
    %c0_i32 = arith.constant 0 : i32
    %c0_i32_0 = arith.constant 0 : i32
    return %arg0, %c0_i32 : i32, i32
  }
}

</mosaic_0001>

<llo_original>
// kernel: tpu_custom_call.1
$region0: #{tpu_custom_call.1}
  #allocation0 [shape = 'u32[]', space=smem, size = 0x4, offset = 0x4, fixed_abs, tag = 'smem constant byte address 0x4 - core index']
  #allocation1 [shape = 'u32[144,128]{1,0:T(1,128)}', space=vmem, size = 0x12000, scoped, tag = 'internal scratch']
  %s0 = inlined_call_operand.hbm [shape: f32[16,128], index: 0, kind: input, shape index: {}]
  %s1 = inlined_call_operand.hbm [shape: f32[16,128], index: 1, kind: input, shape index: {}]
  %s2 = inlined_call_operand.hbm [shape: f32[8,128], index: 2, kind: output, shape index: {}]
  %s3 = sld [smem:[#allocation0]]
  $region30: #{tpu_custom_call.1} parent=0
    _
  %s5 = ssub.s32 1, %s3
  %s6 = scalar_select 0, %s5, %s3
  $region1: #{tpu_custom_call.1} parent=0
    #allocation2 [shape = 'u8[8192]{0}', space=vmem, size = 0x2000, scoped, tag = 'input window, operand 0, single buffered']
    #allocation3 [shape = 's32[1]{0}', space=sflag, size = 0x4, scoped, tag = 'scoped memory for tpu_custom_call.1']
    #allocation4 [shape = 's32[1]{0}', space=sflag, size = 0x4, scoped, tag = 'scoped memory for tpu_custom_call.1']
    #allocation5 [shape = 'u8[8192]{0}', space=vmem, size = 0x2000, scoped, tag = 'input window, operand 1, single buffered']
    #allocation6 [shape = 's32[1]{0}', space=sflag, size = 0x4, scoped, tag = 'scoped memory for tpu_custom_call.1']
    #allocation7 [shape = 'u8[4096]{0}', space=vmem, size = 0x1000, scoped, tag = 'output window, operand 0, single buffered']
    %7 = vsyncpa [#allocation3], 0
    %8 = vsyncpa [#allocation6], 0
    %9 = vsyncpa [#allocation4], 0
    // Predicated region
    $region2: #{tpu_custom_call.1} parent=1 // pred_check
      _
    $region3: #{tpu_custom_call.1} parent=1 // pred_check_branch
      %11 = sbr.rel (0) target = $region5
    $region4: #{tpu_custom_call.1} parent=1 // pred_region
      %s12 = sadd.s32 0, 0
      %s13 = smul.u32 2, %s12
      %s15 = ssub.s32 256, 256
      %16 = vsyncadd [#allocation3], %s15
      %s17 = smul.addr %s13, 128
      %s18 = scalar_lea.hbm %s0, %s17
      %s19 = sshll.u32 [#allocation2], 4
      %s20 = int_to_ptr.vmem [resolvable:$true] %s19
      %25 = dma.hbm_to_vmem [thread:$0]  %s18, 256, %s20, [#allocation3], 128, 128, 8
    $region5: #{tpu_custom_call.1} parent=1 // pred_fallthru
      _
    // Predicated region
    $region6: #{tpu_custom_call.1} parent=1 // pred_check
      _
    $region7: #{tpu_custom_call.1} parent=1 // pred_check_branch
      %27 = sbr.rel (0) target = $region9
    $region8: #{tpu_custom_call.1} parent=1 // pred_region
      %s28 = sadd.s32 0, 0
      %s29 = smul.u32 2, %s28
      %s31 = ssub.s32 256, 256
      %32 = vsyncadd [#allocation6], %s31
      %s33 = smul.addr %s29, 128
      %s34 = scalar_lea.hbm %s1, %s33
      %s35 = sshll.u32 [#allocation5], 4
      %s36 = int_to_ptr.vmem [resolvable:$true] %s35
      %41 = dma.hbm_to_vmem [thread:$0]  %s34, 256, %s36, [#allocation6], 128, 128, 8
    $region9: #{tpu_custom_call.1} parent=1 // pred_fallthru
      _
    // Predicated region
    $region10: #{tpu_custom_call.1} parent=1 // pred_check
      _
    $region11: #{tpu_custom_call.1} parent=1 // pred_check_branch
      %43 = sbr.rel (0) target = $region13
    $region12: #{tpu_custom_call.1} parent=1 // pred_region
      %44 = dma.done [#allocation3], 256
    $region13: #{tpu_custom_call.1} parent=1 // pred_fallthru
      _
    // Predicated region
    $region14: #{tpu_custom_call.1} parent=1 // pred_check
      _
    $region15: #{tpu_custom_call.1} parent=1 // pred_check_branch
      %46 = sbr.rel (0) target = $region17
    $region16: #{tpu_custom_call.1} parent=1 // pred_region
      %47 = dma.done [#allocation6], 256
    $region17: #{tpu_custom_call.1} parent=1 // pred_fallthru
      _
    %s48 = sadd.s32 0, 0
    %s49 = smul.u32 2, %s48
    %s50 = sadd.s32 0, 0
    %s51 = smul.u32 2, %s50
    %p52 = scmp.eq.s32.totalorder 0, 0
    // Predicated region
    $region18: #{tpu_custom_call.1} parent=1 // pred_check
      %p53 = pneg %p52
    $region19: #{tpu_custom_call.1} parent=1 // pred_check_branch
      %55 = sbr.rel (%p53) target = $region21
    $region20: #{tpu_custom_call.1} parent=1 // pred_region
      %56 = vst [vmem:[#allocation7] sm:$0xff] 0.0
    $region21: #{tpu_custom_call.1} parent=1 // pred_fallthru
      _
    %v57 = vld [vmem:[#allocation2] sm:$0xff]
    %v58 = vld [vmem:[#allocation2 + $0x8] sm:$0xff]
    %v59 = vld [vmem:[#allocation5] sm:$0xff]
    %v60 = vld [vmem:[#allocation5 + $0x8] sm:$0xff]
    %v61 = vsub.f32 %v57, %v59
    %v62 = vsub.f32 %v58, %v60
    %v63 = vtanh.pop %v61
    %v64 = vtanh.pop %v62
    %v65 = vmul.f32 %v61, %v63
    %v66 = vmul.f32 %v62, %v64
    %v67 = vld [vmem:[#allocation7] sm:$0xff]
    %v68 = vadd.f32 %v65, %v66
    %v69 = vadd.f32 %v67, %v68
    %70 = vst [vmem:[#allocation7] sm:$0xff] %v69
    // Predicated region
    $region22: #{tpu_custom_call.1} parent=1 // pred_check
      _
    $region23: #{tpu_custom_call.1} parent=1 // pred_check_branch
      %72 = sbr.rel (0) target = $region25
    $region24: #{tpu_custom_call.1} parent=1 // pred_region
      %s74 = ssub.s32 128, 128
      %75 = vsyncadd [#allocation4], %s74
      %s77 = sshll.u32 [#allocation7], 4
      %s78 = int_to_ptr.vmem [resolvable:$true] %s77
      %80 = dma.vmem_to_hbm [thread:$0]  %s78, 128, %s2, [#allocation4]
    $region25: #{tpu_custom_call.1} parent=1 // pred_fallthru
      _
    // Predicated region
    $region26: #{tpu_custom_call.1} parent=1 // pred_check
      _
    $region27: #{tpu_custom_call.1} parent=1 // pred_check_branch
      %82 = sbr.rel (0) target = $region29
    $region28: #{tpu_custom_call.1} parent=1 // pred_region
      %83 = dma.done [#allocation4], 128
    $region29: #{tpu_custom_call.1} parent=1 // pred_fallthru
      _
    %84 = vsyncpa [#allocation3], 1
    %85 = vsyncpa [#allocation6], 1
    %86 = vsyncpa [#allocation4], 1

</llo_original>
